<compile_context>
chip_gen: v7x
topology: tpu7x:2x2x1
jax: 0.10.0
libtpu: 0.0.40
codegen_flags: <defaults>
</compile_context>

<pallas_src>
import math

import jax
import jax.numpy as jnp
from jax.experimental import pallas as pl
from jax.experimental.pallas import tpu as pltpu


def _attention_kernel(x_ref, wqkv_ref, bqkv_ref, wo_ref, bo_ref,
                      gamma_ref, beta_ref, y_ref, attn_ref, qkv_ref):
    # x_ref: (T, D) f32 (batch dim squeezed by BlockSpec), resident across tiles
    # wqkv_ref: (D, 3D) bf16 ; bqkv_ref: (1, 3D) f32 ; wo_ref: (D, D) bf16
    # y_ref: (tq, D) f32 ; attn_ref: (tq, T) bf16 ; qkv_ref: (3, T, D) bf16 scratch
    T, D = x_ref.shape
    tq = y_ref.shape[0]
    qi = pl.program_id(1)

    # --- Fused QKV projection: one MXU matmul with N = 3D, computed ONCE per
    # batch element (sequence-tile axis is "arbitrary", so qi == 0 runs first
    # and the bf16 scratch stays resident for the remaining tiles of this batch).
    # Do NOT mark the tile axis "parallel" without per-core scratch + QKV pass.
    @pl.when(qi == 0)
    def _():
        x_bf = x_ref[...].astype(jnp.bfloat16)                     # (T, D)
        qkv = (jnp.dot(x_bf, wqkv_ref[...],
                       preferred_element_type=jnp.float32)
               + bqkv_ref[...]).astype(jnp.bfloat16)               # (T, 3D)
        qkv_ref[0] = qkv[:, :D]                                    # Q
        qkv_ref[1] = qkv[:, D:2 * D]                               # K
        qkv_ref[2] = qkv[:, 2 * D:]                                # V

    q_start = pl.multiple_of(qi * tq, tq)
    q = qkv_ref[0, pl.ds(q_start, tq), :]                          # (tq, D) bf16
    k = qkv_ref[1]                                                 # (T, D)  bf16
    v = qkv_ref[2]                                                 # (T, D)  bf16

    # --- scores = Q @ K^T / sqrt(D): contract K on its last dim directly,
    # no explicit transpose (keeps the XLU out of the critical path).
    scale = 1.0 / math.sqrt(D)
    scores = jax.lax.dot_general(
        q, k, dimension_numbers=(((1,), (1,)), ((), ())),
        preferred_element_type=jnp.float32) * scale                # (tq, T) f32

    # --- softmax in f32 (stable); reciprocal on the otherwise-idle EUP slot.
    m = jnp.max(scores, axis=-1, keepdims=True)
    e = jnp.exp(scores - m)
    denom = jnp.sum(e, axis=-1, keepdims=True)
    attn = e * pl.reciprocal(denom, approx=True)                   # (tq, T) f32

    # --- out = attn @ V + x (residual), bf16 MXU, f32 accumulate.
    x_q = x_ref[pl.ds(q_start, tq), :]                             # (tq, D) f32
    out = jnp.dot(attn.astype(jnp.bfloat16), v,
                  preferred_element_type=jnp.float32) + x_q        # (tq, D) f32

    # --- LayerNorm over last dim (eps matches nn.LayerNorm default), f32.
    mean = jnp.mean(out, axis=-1, keepdims=True)
    centered = out - mean
    var = jnp.mean(centered * centered, axis=-1, keepdims=True)
    normed = centered * jax.lax.rsqrt(var + 1e-5) * gamma_ref[...] + beta_ref[...]

    # --- output projection + residual with `out`.
    y = (jnp.dot(normed.astype(jnp.bfloat16), wo_ref[...],
                 preferred_element_type=jnp.float32)
         + bo_ref[...] + out)

    y_ref[...] = y
    attn_ref[...] = attn.astype(attn_ref.dtype)


def _choose_seq_tile(T):
    """Largest multiple-of-8 divisor of T that is <= 256; full T as a fallback."""
    if T % 8 != 0:
        return T
    best = 8
    for cand in range(8, min(T, 256) + 1, 8):
        if T % cand == 0:
            best = cand
    return best


def attention_layer(x, params, attn_dtype=jnp.bfloat16):
    """x: (B, T, D) float32. params: dict with fused bf16 weights (see init_params).

    Returns (y f32 (B,T,D), attn (B,T,T) in `attn_dtype` — bf16 by default to halve
    the dominant HBM writeback; pass jnp.float32 if the consumer needs full precision).
    """
    B, T, D = x.shape
    tq = _choose_seq_tile(T)
    num_q = T // tq

    # Constant-index operands: DMA'd once, so a single VMEM buffer suffices.
    def rep_spec(shape):
        return pl.BlockSpec(shape, lambda b, j: (0,) * len(shape),
                            pipeline_mode=pl.Buffered(1))

    in_specs = [
        pl.BlockSpec((None, T, D), lambda b, j: (b, 0, 0)),   # x (resident across j)
        rep_spec((D, 3 * D)),                                 # wqkv (bf16)
        rep_spec((1, 3 * D)),                                 # bqkv (f32)
        rep_spec((D, D)),                                     # wo (bf16)
        rep_spec((1, D)),                                     # bo
        rep_spec((1, D)),                                     # gamma
        rep_spec((1, D)),                                     # beta
    ]
    out_specs = (
        pl.BlockSpec((None, tq, D), lambda b, j: (b, j, 0)),  # y
        pl.BlockSpec((None, tq, T), lambda b, j: (b, j, 0)),  # attn
    )
    out_shape = (
        jax.ShapeDtypeStruct((B, T, D), jnp.float32),
        jax.ShapeDtypeStruct((B, T, T), attn_dtype),
    )

    # Right-size the scoped-VMEM limit from the real footprint (critical on
    # v7x's 64 MiB; avoids both under- and over-provisioning elsewhere).
    attn_bytes = jnp.dtype(attn_dtype).itemsize
    footprint = (
        3 * T * D * 2                       # bf16 QKV scratch
        + 2 * T * D * 4                     # x block (double-buffered)
        + (D * 3 * D + D * D) * 2           # bf16 weights (single-buffered)
        + 6 * D * 4                         # biases / LN params
        + 2 * tq * D * 4                    # y output blocks
        + 2 * tq * T * attn_bytes           # attn output blocks
        + 3 * tq * T * 4                    # f32 scores/exp/attn temporaries
    )
    try:
        vmem_cap = pltpu.get_tpu_info().vmem_capacity_bytes
    except Exception:
        vmem_cap = 64 * 1024 * 1024
    vmem_limit = min(max(int(footprint * 1.3) + (2 << 20), 16 << 20), vmem_cap)

    return pl.pallas_call(
        _attention_kernel,
        out_shape=out_shape,
        grid=(B, num_q),
        in_specs=in_specs,
        out_specs=out_specs,
        scratch_shapes=[pltpu.VMEM((3, T, D), jnp.bfloat16)],  # fused QKV, per batch
        compiler_params=pltpu.CompilerParams(
            dimension_semantics=("parallel", "arbitrary"),
            vmem_limit_bytes=vmem_limit,
        ),
    )(x,
      params["wqkv"], params["bqkv"],
      params["wo"], params["bo"],
      params["gamma"], params["beta"])


def init_params(key, d_model):
    """Deterministic init mimicking nn.Linear default (uniform +/- 1/sqrt(fan_in)).

    Q/K/V weights are concatenated into one (D, 3D) matrix and stored bf16
    (halves weight DMA bytes, doubles MXU throughput); biases / LN params stay f32.
    """
    ks = jax.random.split(key, 8)
    bound = 1.0 / math.sqrt(d_model)

    def lin(kw, kb):
        w = jax.random.uniform(kw, (d_model, d_model), jnp.float32, -bound, bound)
        b = jax.random.uniform(kb, (1, d_model), jnp.float32, -bound, bound)
        return w.T, b  # transposed so kernel computes x @ w_t + b

    wq_t, bq = lin(ks[0], ks[1])
    wk_t, bk = lin(ks[2], ks[3])
    wv_t, bv = lin(ks[4], ks[5])
    wo_t, bo = lin(ks[6], ks[7])

    return {
        "wqkv": jnp.concatenate([wq_t, wk_t, wv_t], axis=-1).astype(jnp.bfloat16),
        "bqkv": jnp.concatenate([bq, bk, bv], axis=-1),
        "wo": wo_t.astype(jnp.bfloat16),
        "bo": bo,
        "gamma": jnp.ones((1, d_model), jnp.float32),
        "beta": jnp.zeros((1, d_model), jnp.float32),
    }


def _reference(x, p):
    """Pure-JAX f32 reference mirroring the PyTorch forward (same bf16 weights upcast)."""
    D = x.shape[-1]
    wqkv = p["wqkv"].astype(jnp.float32)
    qkv = jnp.einsum("btd,de->bte", x, wqkv) + p["bqkv"]
    q, k, v = qkv[..., :D], qkv[..., D:2 * D], qkv[..., 2 * D:]
    scores = jnp.einsum("btd,bsd->bts", q, k) / math.sqrt(D)
    attn = jax.nn.softmax(scores, axis=-1)
    out = jnp.einsum("bts,bsd->btd", attn, v) + x
    mean = out.mean(-1, keepdims=True)
    var = ((out - mean) ** 2).mean(-1, keepdims=True)
    normed = (out - mean) * jax.lax.rsqrt(var + 1e-5) * p["gamma"] + p["beta"]
    y = normed @ p["wo"].astype(jnp.float32) + p["bo"] + out
    return y, attn


if __name__ == "__main__":
    B, T, D = 2, 8, 32
    key = jax.random.PRNGKey(0)
    kx, kp = jax.random.split(key)
    x = jax.random.normal(kx, (B, T, D), jnp.float32)
    params = init_params(kp, D)

    y, attn = attention_layer(x, params)
    y = jax.block_until_ready(y)
    attn = jax.block_until_ready(attn)

    y_ref, attn_ref = _reference(x, params)
    # Tolerances account for bf16 MXU operands, bf16 QKV scratch / attn output,
    # and the approx EUP reciprocal (weights are identical bf16 in kernel and
    # reference, so only activation casts differ).
    assert jnp.allclose(attn.astype(jnp.float32), attn_ref,
                        atol=2e-2, rtol=2e-2), "attn mismatch"
    assert jnp.allclose(y, y_ref, atol=5e-2, rtol=5e-2), "output mismatch"

    print("KERNEL_OK")
</pallas_src>

<mosaic_0001>
module attributes {stable_mosaic.version = 11 : i64} {
  func.func @_attention_kernel(%arg0: i32, %arg1: i32, %arg2: memref<1x8x32xf32, #tpu.memory_space<vmem>>, %arg3: memref<32x96xbf16, #tpu.memory_space<vmem>>, %arg4: memref<1x96xf32, #tpu.memory_space<vmem>>, %arg5: memref<32x32xbf16, #tpu.memory_space<vmem>>, %arg6: memref<1x32xf32, #tpu.memory_space<vmem>>, %arg7: memref<1x32xf32, #tpu.memory_space<vmem>>, %arg8: memref<1x32xf32, #tpu.memory_space<vmem>>, %arg9: memref<1x8x32xf32, #tpu.memory_space<vmem>>, %arg10: memref<1x8x8xbf16, #tpu.memory_space<vmem>>, %arg11: memref<3x8x32xbf16, #tpu.memory_space<vmem>>) attributes {dimension_semantics = [#tpu.dimension_semantics<parallel>, #tpu.dimension_semantics<arbitrary>], iteration_bounds = array<i64: 2, 1>, scalar_prefetch = 0 : i64, scratch_operands = 1 : i64, tpu.core_type = #tpu.core_type<tc>, window_params = [{transform_indices = @transform_0, window_bounds = array<i64: 1, 8, 32>}, {pipeline_mode = #tpu.pipeline_mode<synchronous>, transform_indices = @transform_1, window_bounds = array<i64: 32, 96>}, {pipeline_mode = #tpu.pipeline_mode<synchronous>, transform_indices = @transform_2, window_bounds = array<i64: 1, 96>}, {pipeline_mode = #tpu.pipeline_mode<synchronous>, transform_indices = @transform_3, window_bounds = array<i64: 32, 32>}, {pipeline_mode = #tpu.pipeline_mode<synchronous>, transform_indices = @transform_4, window_bounds = array<i64: 1, 32>}, {pipeline_mode = #tpu.pipeline_mode<synchronous>, transform_indices = @transform_5, window_bounds = array<i64: 1, 32>}, {pipeline_mode = #tpu.pipeline_mode<synchronous>, transform_indices = @transform_6, window_bounds = array<i64: 1, 32>}, {transform_indices = @transform_7, window_bounds = array<i64: 1, 8, 32>}, {transform_indices = @transform_8, window_bounds = array<i64: 1, 8, 8>}]} {
    %c0_i32 = arith.constant 0 : i32
    %0 = arith.cmpi eq, %arg1, %c0_i32 : i32
    %1 = arith.extui %0 : i1 to i32
    %c0_i32_0 = arith.constant 0 : i32
    %2 = arith.cmpi ne, %1, %c0_i32_0 : i32
    scf.if %2 {
      %c0_32 = arith.constant 0 : index
      %c0_33 = arith.constant 0 : index
      %c0_34 = arith.constant 0 : index
      %67 = vector.load %arg2[%c0_32, %c0_33, %c0_34] : memref<1x8x32xf32, #tpu.memory_space<vmem>>, vector<1x8x32xf32>
      %68 = vector.shape_cast %67 : vector<1x8x32xf32> to vector<8x32xf32>
      %69 = arith.truncf %68 : vector<8x32xf32> to vector<8x32xbf16>
      %c0_35 = arith.constant 0 : index
      %c0_36 = arith.constant 0 : index
      %70 = vector.load %arg3[%c0_35, %c0_36] : memref<32x96xbf16, #tpu.memory_space<vmem>>, vector<32x96xbf16>
      %cst_37 = arith.constant dense<0.000000e+00> : vector<8x96xf32>
      %71 = tpu.matmul %69, %70, %cst_37 {dimension_numbers = #tpu.dot_dimension_numbers<[1], [0], [0], [1], [0, 0, 1, 1], [], []>} : vector<8x32xbf16>, vector<32x96xbf16>, vector<8x96xf32> -> vector<8x96xf32>
      %c0_38 = arith.constant 0 : index
      %c0_39 = arith.constant 0 : index
      %72 = vector.load %arg4[%c0_38, %c0_39] : memref<1x96xf32, #tpu.memory_space<vmem>>, vector<1x96xf32>
      %73 = vector.broadcast %72 : vector<1x96xf32> to vector<8x96xf32>
      %74 = arith.addf %71, %73 : vector<8x96xf32>
      %75 = arith.truncf %74 : vector<8x96xf32> to vector<8x96xbf16>
      %76 = vector.extract_strided_slice %75 {offsets = [0, 0], sizes = [8, 32], strides = [1, 1]} : vector<8x96xbf16> to vector<8x32xbf16>
      %c0_40 = arith.constant 0 : index
      %c0_41 = arith.constant 0 : index
      %c0_42 = arith.constant 0 : index
      %77 = vector.load %arg11[%c0_40, %c0_41, %c0_42] : memref<3x8x32xbf16, #tpu.memory_space<vmem>>, vector<1x8x32xbf16>
      %78 = vector.shape_cast %77 : vector<1x8x32xbf16> to vector<8x32xbf16>
      %79 = vector.shape_cast %76 : vector<8x32xbf16> to vector<1x8x32xbf16>
      tpu.vector_store %arg11[%c0_40, %c0_41, %c0_42], %79 {strides = array<i32>} : memref<3x8x32xbf16, #tpu.memory_space<vmem>>, vector<1x8x32xbf16>,
      %80 = vector.extract_strided_slice %75 {offsets = [0, 32], sizes = [8, 32], strides = [1, 1]} : vector<8x96xbf16> to vector<8x32xbf16>
      %c1_43 = arith.constant 1 : index
      %c0_44 = arith.constant 0 : index
      %c0_45 = arith.constant 0 : index
      %81 = vector.load %arg11[%c1_43, %c0_44, %c0_45] : memref<3x8x32xbf16, #tpu.memory_space<vmem>>, vector<1x8x32xbf16>
      %82 = vector.shape_cast %81 : vector<1x8x32xbf16> to vector<8x32xbf16>
      %83 = vector.shape_cast %80 : vector<8x32xbf16> to vector<1x8x32xbf16>
      tpu.vector_store %arg11[%c1_43, %c0_44, %c0_45], %83 {strides = array<i32>} : memref<3x8x32xbf16, #tpu.memory_space<vmem>>, vector<1x8x32xbf16>,
      %84 = vector.extract_strided_slice %75 {offsets = [0, 64], sizes = [8, 32], strides = [1, 1]} : vector<8x96xbf16> to vector<8x32xbf16>
      %c2_46 = arith.constant 2 : index
      %c0_47 = arith.constant 0 : index
      %c0_48 = arith.constant 0 : index
      %85 = vector.load %arg11[%c2_46, %c0_47, %c0_48] : memref<3x8x32xbf16, #tpu.memory_space<vmem>>, vector<1x8x32xbf16>
      %86 = vector.shape_cast %85 : vector<1x8x32xbf16> to vector<8x32xbf16>
      %87 = vector.shape_cast %84 : vector<8x32xbf16> to vector<1x8x32xbf16>
      tpu.vector_store %arg11[%c2_46, %c0_47, %c0_48], %87 {strides = array<i32>} : memref<3x8x32xbf16, #tpu.memory_space<vmem>>, vector<1x8x32xbf16>,
    } else {
    }
    %c8_i32 = arith.constant 8 : i32
    %3 = arith.muli %arg1, %c8_i32 : i32
    %4 = tpu.assume_multiple %3, 8 : i32
    %c0 = arith.constant 0 : index
    %5 = arith.index_cast %4 : i32 to index
    %c0_1 = arith.constant 0 : index
    %6 = vector.load %arg11[%c0, %5, %c0_1] : memref<3x8x32xbf16, #tpu.memory_space<vmem>>, vector<1x8x32xbf16>
    %7 = vector.shape_cast %6 : vector<1x8x32xbf16> to vector<8x32xbf16>
    %c1 = arith.constant 1 : index
    %c0_2 = arith.constant 0 : index
    %c0_3 = arith.constant 0 : index
    %8 = vector.load %arg11[%c1, %c0_2, %c0_3] : memref<3x8x32xbf16, #tpu.memory_space<vmem>>, vector<1x8x32xbf16>
    %9 = vector.shape_cast %8 : vector<1x8x32xbf16> to vector<8x32xbf16>
    %c2 = arith.constant 2 : index
    %c0_4 = arith.constant 0 : index
    %c0_5 = arith.constant 0 : index
    %10 = vector.load %arg11[%c2, %c0_4, %c0_5] : memref<3x8x32xbf16, #tpu.memory_space<vmem>>, vector<1x8x32xbf16>
    %11 = vector.shape_cast %10 : vector<1x8x32xbf16> to vector<8x32xbf16>
    %cst = arith.constant dense<0.000000e+00> : vector<8x8xf32>
    %12 = tpu.matmul %7, %9, %cst {dimension_numbers = #tpu.dot_dimension_numbers<[1], [1], [0], [0], [0, 0, 1, 0], [], []>} : vector<8x32xbf16>, vector<8x32xbf16>, vector<8x8xf32> -> vector<8x8xf32>
    %cst_6 = arith.constant 0.176776692 : f32
    %13 = vector.broadcast %cst_6 : f32 to vector<8x8xf32>
    %14 = arith.mulf %12, %13 : vector<8x8xf32>
    %cst_7 = arith.constant dense<0xFF800000> : vector<8xf32>
    %15 = vector.multi_reduction <maximumf>, %14, %cst_7 [1] : vector<8x8xf32> to vector<8xf32>
    %16 = vector.shape_cast %15 : vector<8xf32> to vector<8x1xf32>
    %17 = vector.broadcast %16 : vector<8x1xf32> to vector<8x8xf32>
    %18 = arith.subf %14, %17 : vector<8x8xf32>
    %19 = math.exp %18 : vector<8x8xf32>
    %cst_8 = arith.constant dense<0.000000e+00> : vector<8xf32>
    %20 = vector.multi_reduction <add>, %19, %cst_8 [1] : vector<8x8xf32> to vector<8xf32>
    %21 = vector.shape_cast %20 : vector<8xf32> to vector<8x1xf32>
    %22 = tpu.reciprocal %21 {approx = true} : vector<8x1xf32> -> vector<8x1xf32>
    %23 = vector.broadcast %22 : vector<8x1xf32> to vector<8x8xf32>
    %24 = arith.mulf %19, %23 : vector<8x8xf32>
    %c0_9 = arith.constant 0 : index
    %25 = arith.index_cast %4 : i32 to index
    %c0_10 = arith.constant 0 : index
    %26 = vector.load %arg2[%c0_9, %25, %c0_10] : memref<1x8x32xf32, #tpu.memory_space<vmem>>, vector<1x8x32xf32>
    %27 = vector.shape_cast %26 : vector<1x8x32xf32> to vector<8x32xf32>
    %28 = arith.truncf %24 : vector<8x8xf32> to vector<8x8xbf16>
    %cst_11 = arith.constant dense<0.000000e+00> : vector<8x32xf32>
    %29 = tpu.matmul %28, %11, %cst_11 {dimension_numbers = #tpu.dot_dimension_numbers<[1], [0], [0], [1], [0, 0, 1, 1], [], []>} : vector<8x8xbf16>, vector<8x32xbf16>, vector<8x32xf32> -> vector<8x32xf32>
    %30 = arith.addf %29, %27 : vector<8x32xf32>
    %cst_12 = arith.constant dense<0.000000e+00> : vector<8xf32>
    %31 = vector.multi_reduction <add>, %30, %cst_12 [1] : vector<8x32xf32> to vector<8xf32>
    %32 = vector.shape_cast %31 : vector<8xf32> to vector<8x1xf32>
    %cst_13 = arith.constant 3.200000e+01 : f32
    %33 = vector.broadcast %cst_13 : f32 to vector<8x1xf32>
    %34 = arith.divf %32, %33 : vector<8x1xf32>
    %35 = vector.broadcast %34 : vector<8x1xf32> to vector<8x32xf32>
    %36 = arith.subf %30, %35 : vector<8x32xf32>
    %37 = arith.mulf %36, %36 : vector<8x32xf32>
    %cst_14 = arith.constant dense<0.000000e+00> : vector<8xf32>
    %38 = vector.multi_reduction <add>, %37, %cst_14 [1] : vector<8x32xf32> to vector<8xf32>
    %39 = vector.shape_cast %38 : vector<8xf32> to vector<8x1xf32>
    %cst_15 = arith.constant 3.200000e+01 : f32
    %40 = vector.broadcast %cst_15 : f32 to vector<8x1xf32>
    %41 = arith.divf %39, %40 : vector<8x1xf32>
    %cst_16 = arith.constant 9.99999974E-6 : f32
    %42 = vector.broadcast %cst_16 : f32 to vector<8x1xf32>
    %43 = arith.addf %41, %42 : vector<8x1xf32>
    %44 = math.rsqrt %43 : vector<8x1xf32>
    %45 = vector.broadcast %44 : vector<8x1xf32> to vector<8x32xf32>
    %46 = arith.mulf %36, %45 : vector<8x32xf32>
    %c0_17 = arith.constant 0 : index
    %c0_18 = arith.constant 0 : index
    %47 = vector.load %arg7[%c0_17, %c0_18] : memref<1x32xf32, #tpu.memory_space<vmem>>, vector<1x32xf32>
    %48 = vector.broadcast %47 : vector<1x32xf32> to vector<8x32xf32>
    %49 = arith.mulf %46, %48 : vector<8x32xf32>
    %c0_19 = arith.constant 0 : index
    %c0_20 = arith.constant 0 : index
    %50 = vector.load %arg8[%c0_19, %c0_20] : memref<1x32xf32, #tpu.memory_space<vmem>>, vector<1x32xf32>
    %51 = vector.broadcast %50 : vector<1x32xf32> to vector<8x32xf32>
    %52 = arith.addf %49, %51 : vector<8x32xf32>
    %53 = arith.truncf %52 : vector<8x32xf32> to vector<8x32xbf16>
    %c0_21 = arith.constant 0 : index
    %c0_22 = arith.constant 0 : index
    %54 = vector.load %arg5[%c0_21, %c0_22] : memref<32x32xbf16, #tpu.memory_space<vmem>>, vector<32x32xbf16>
    %cst_23 = arith.constant dense<0.000000e+00> : vector<8x32xf32>
    %55 = tpu.matmul %53, %54, %cst_23 {dimension_numbers = #tpu.dot_dimension_numbers<[1], [0], [0], [1], [0, 0, 1, 1], [], []>} : vector<8x32xbf16>, vector<32x32xbf16>, vector<8x32xf32> -> vector<8x32xf32>
    %c0_24 = arith.constant 0 : index
    %c0_25 = arith.constant 0 : index
    %56 = vector.load %arg6[%c0_24, %c0_25] : memref<1x32xf32, #tpu.memory_space<vmem>>, vector<1x32xf32>
    %57 = vector.broadcast %56 : vector<1x32xf32> to vector<8x32xf32>
    %58 = arith.addf %55, %57 : vector<8x32xf32>
    %59 = arith.addf %58, %30 : vector<8x32xf32>
    %c0_26 = arith.constant 0 : index
    %c0_27 = arith.constant 0 : index
    %c0_28 = arith.constant 0 : index
    %60 = vector.load %arg9[%c0_26, %c0_27, %c0_28] : memref<1x8x32xf32, #tpu.memory_space<vmem>>, vector<1x8x32xf32>
    %61 = vector.shape_cast %60 : vector<1x8x32xf32> to vector<8x32xf32>
    %62 = vector.shape_cast %59 : vector<8x32xf32> to vector<1x8x32xf32>
    tpu.vector_store %arg9[%c0_26, %c0_27, %c0_28], %62 {strides = array<i32>} : memref<1x8x32xf32, #tpu.memory_space<vmem>>, vector<1x8x32xf32>,
    %63 = arith.truncf %24 : vector<8x8xf32> to vector<8x8xbf16>
    %c0_29 = arith.constant 0 : index
    %c0_30 = arith.constant 0 : index
    %c0_31 = arith.constant 0 : index
    %64 = vector.load %arg10[%c0_29, %c0_30, %c0_31] : memref<1x8x8xbf16, #tpu.memory_space<vmem>>, vector<1x8x8xbf16>
    %65 = vector.shape_cast %64 : vector<1x8x8xbf16> to vector<8x8xbf16>
    %66 = vector.shape_cast %63 : vector<8x8xbf16> to vector<1x8x8xbf16>
    tpu.vector_store %arg10[%c0_29, %c0_30, %c0_31], %66 {strides = array<i32>} : memref<1x8x8xbf16, #tpu.memory_space<vmem>>, vector<1x8x8xbf16>,
    return
  }
  func.func @transform_0(%arg0: i32, %arg1: i32) -> (i32, i32, i32) {
    %c0_i32 = arith.constant 0 : i32
    %c0_i32_0 = arith.constant 0 : i32
    %c0_i32_1 = arith.constant 0 : i32
    return %arg0, %c0_i32, %c0_i32_0 : i32, i32, i32
  }
  func.func @transform_1(%arg0: i32, %arg1: i32) -> (i32, i32) {
    %c0_i32 = arith.constant 0 : i32
    %c0_i32_0 = arith.constant 0 : i32
    %c0_i32_1 = arith.constant 0 : i32
    return %c0_i32, %c0_i32_0 : i32, i32
  }
  func.func @transform_2(%arg0: i32, %arg1: i32) -> (i32, i32) {
    %c0_i32 = arith.constant 0 : i32
    %c0_i32_0 = arith.constant 0 : i32
    %c0_i32_1 = arith.constant 0 : i32
    return %c0_i32, %c0_i32_0 : i32, i32
  }
  func.func @transform_3(%arg0: i32, %arg1: i32) -> (i32, i32) {
    %c0_i32 = arith.constant 0 : i32
    %c0_i32_0 = arith.constant 0 : i32
    %c0_i32_1 = arith.constant 0 : i32
    return %c0_i32, %c0_i32_0 : i32, i32
  }
  func.func @transform_4(%arg0: i32, %arg1: i32) -> (i32, i32) {
    %c0_i32 = arith.constant 0 : i32
    %c0_i32_0 = arith.constant 0 : i32
    %c0_i32_1 = arith.constant 0 : i32
    return %c0_i32, %c0_i32_0 : i32, i32
  }
  func.func @transform_5(%arg0: i32, %arg1: i32) -> (i32, i32) {
    %c0_i32 = arith.constant 0 : i32
    %c0_i32_0 = arith.constant 0 : i32
    %c0_i32_1 = arith.constant 0 : i32
    return %c0_i32, %c0_i32_0 : i32, i32
  }
  func.func @transform_6(%arg0: i32, %arg1: i32) -> (i32, i32) {
    %c0_i32 = arith.constant 0 : i32
    %c0_i32_0 = arith.constant 0 : i32
    %c0_i32_1 = arith.constant 0 : i32
    return %c0_i32, %c0_i32_0 : i32, i32
  }
  func.func @transform_7(%arg0: i32, %arg1: i32) -> (i32, i32, i32) {
    %c0_i32 = arith.constant 0 : i32
    %c0_i32_0 = arith.constant 0 : i32
    return %arg0, %arg1, %c0_i32 : i32, i32, i32
  }
  func.func @transform_8(%arg0: i32, %arg1: i32) -> (i32, i32, i32) {
    %c0_i32 = arith.constant 0 : i32
    %c0_i32_0 = arith.constant 0 : i32
    return %arg0, %arg1, %c0_i32 : i32, i32, i32
  }
}

</mosaic_0001>

<llo_original>
// kernel: tpu_custom_call.1
$region0: #{tpu_custom_call.1}
  #allocation0 [shape = 'u32[]', space=smem, size = 0x4, offset = 0x4, fixed_abs, tag = 'smem constant byte address 0x4 - core index']
  #allocation1 [shape = 'u32[144,128]{1,0:T(1,128)}', space=vmem, size = 0x12000, scoped, tag = 'internal scratch']
  #allocation2 [shape = 'bf16[3,8,32]{2,1,0:T(8,128)(2,1)}', space=vmem, size = 0x1800, scoped, tag = 'scratch operand']
  %s0 = inlined_call_operand.hbm [shape: f32[2,8,32], index: 0, kind: input, shape index: {}]
  %s1 = inlined_call_operand.hbm [shape: bf16[32,96], index: 1, kind: input, shape index: {}]
  %s2 = inlined_call_operand.vmem [shape: f32[1,96], index: 2, kind: input, shape index: {}]
  %s3 = inlined_call_operand.hbm [shape: bf16[32,32], index: 3, kind: input, shape index: {}]
  %s4 = inlined_call_operand.vmem [shape: f32[1,32], index: 4, kind: input, shape index: {}]
  %s5 = inlined_call_operand.vmem [shape: f32[1,32], index: 5, kind: input, shape index: {}]
  %s6 = inlined_call_operand.vmem [shape: f32[1,32], index: 6, kind: input, shape index: {}]
  %s7 = inlined_call_operand.hbm [shape: f32[2,8,32], index: 7, kind: output, shape index: {0}]
  %s8 = inlined_call_operand.hbm [shape: bf16[2,8,8], index: 8, kind: output, shape index: {1}]
  %9 = xla_tuple %s7, %s8
  %s10 = sld [smem:[#allocation0]]
  $region85: #{tpu_custom_call.1} parent=0
    _
  %s12 = ssub.s32 1, %s10
  %s13 = scalar_select 0, %s12, %s10
  $region1: #{tpu_custom_call.1} parent=0
    #allocation3 [shape = 'u8[8192]{0}', space=vmem, size = 0x2000, scoped, tag = 'input window, operand 0']
    #allocation4 [shape = 's32[2]{0}', space=sflag, size = 0x8, scoped, tag = 'scoped memory for tpu_custom_call.1']
    #allocation5 [shape = 's32[2]{0}', space=sflag, size = 0x8, scoped, tag = 'scoped memory for tpu_custom_call.1']
    #allocation6 [shape = 'u8[8192]{0}', space=vmem, size = 0x2000, scoped, tag = 'input window, operand 1, single buffered']
    #allocation7 [shape = 's32[1]{0}', space=sflag, size = 0x4, scoped, tag = 'scoped memory for tpu_custom_call.1']
    #allocation8 [shape = 'u8[8192]{0}', space=vmem, size = 0x2000, scoped, tag = 'input window, operand 3, single buffered']
    #allocation9 [shape = 'u8[8192]{0}', space=vmem, size = 0x2000, scoped, tag = 'output window, operand 0']
    #allocation10 [shape = 'u8[4096]{0}', space=vmem, size = 0x1000, scoped, tag = 'output window, operand 1']
    #allocation11 [shape = 's32[2]{0}', space=sflag, size = 0x8, scoped, tag = 'scoped memory for tpu_custom_call.1']
    %14 = vsyncpa [#allocation4], 0
    %s15 = scalar_lea.sflag [#allocation4], 1
    %16 = vsyncpa %s15, 0
    %17 = vsyncpa [#allocation7], 0
    %18 = vsyncpa [#allocation5], 0
    %s19 = scalar_lea.sflag [#allocation5], 1
    %20 = vsyncpa %s19, 0
    %21 = vsyncpa [#allocation11], 0
    %s22 = scalar_lea.sflag [#allocation11], 1
    %23 = vsyncpa %s22, 0
    loop: start=0, step=1, limit=4
    $region2: #{tpu_custom_call.1} parent=1 // loop_pre_header
      _
    $region3: #{tpu_custom_call.1} parent=1 // loop_header
      %s25 = sphi 0, %s29
      %p26 = scmp.ge.s32.totalorder %s25, 4
      %s32 = sphi 0, %s44
      %s33 = sphi 0, %s40
      %s34 = sphi 0, %s32
      %s35 = sphi 0, %s33
      %s36 = sphi 0, %s34
      %s37 = sphi 0, %s35
      %s47 = sphi 0, %s49
      %s50 = sphi 0, %s47
      %s51 = sphi 0, %s50
      %s67 = sphi 0, %s51
      %s71 = sphi 0, %s71
      %s73 = sphi 0, %s71
      %s74 = sphi 0, %s73
      %s88 = sphi 0, %s74
      %s92 = sphi 0, %s92
      %s94 = sphi 0, %s92
      %s95 = sphi 0, %s94
      %s109 = sphi 0, %s95
      %s113 = sphi 0, %s113
      %s115 = sphi 0, %s113
      %s116 = sphi 0, %s115
      %s130 = sphi 0, %s116
      %s134 = sphi 0, %s134
      %s136 = sphi 0, %s134
      %s137 = sphi 0, %s136
      %s151 = sphi 0, %s137
      %s155 = sphi 0, %s155
      %s157 = sphi 0, %s155
      %s158 = sphi 0, %s157
      %s172 = sphi 0, %s158
      %s176 = sphi 0, %s176
      %s178 = sphi 0, %s176
      %s179 = sphi 0, %s178
      %s193 = sphi 0, %s179
      %s201 = sphi 0, %s203
      %s204 = sphi 0, %s201
      %s205 = sphi 0, %s204
      %s221 = sphi 0, %s205
      %s229 = sphi 0, %s231
      %s232 = sphi 0, %s229
      %s233 = sphi 0, %s232
      %s249 = sphi 0, %s233
    $region4: #{tpu_custom_call.1} parent=1 // loop_header_branch
      %28 = sbr.rel (%p26) target = $region8
    $region5: #{tpu_custom_call.1} parent=1 // loop_body
      %s30 = ssub.s32 %s25, 1
      %s31 = ssub.s32 %s25, 2
      %s38 = sadd.s32 1, %s33
      %p39 = scmp.ge.s32.totalorder %s38, 1
      %s40 = scalar_select %p39, 0, %s38
      %s41 = sadd.s32 1, %s32
      %s42 = scalar_select %p39, %s41, %s32
      %p43 = scmp.ge.s32.totalorder %s42, 2
      %s44 = scalar_select %p43, 0, %s42
      %s45 = ssub.s32 %s32, %s44
      %p46 = scmp.eq.s32.totalorder %s45, 0
      %s48 = sadd.s32 %s47, 1
      %s49 = scalar_select %p46, %s47, %s48
      %p52 = pneg %p46
      %p53 = scmp.eq.s32.totalorder %s25, 1
      %p54 = por %p52, %p53
      %p55 = scmp.ne.s32.totalorder %s47, %s50
      %p56 = scmp.eq.s32.totalorder %s25, 0
      %p57 = por %p55, %p56
      %p58 = scmp.ne.s32.totalorder %s47, %s50
      %p59 = scmp.eq.s32.totalorder %s30, 1
      %p60 = por %p58, %p59
      %p61 = scmp.ne.s32.totalorder %s50, %s51
      %p62 = scmp.eq.s32.totalorder %s30, 0
      %p63 = por %p61, %p62
      %p64 = scmp.ne.s32.totalorder %s50, %s51
      %p65 = scmp.eq.s32.totalorder %s31, 1
      %p66 = por %p64, %p65
      %p68 = scmp.ne.s32.totalorder %s51, %s67
      %p69 = scmp.eq.s32.totalorder %s31, 0
      %p70 = por %p68, %p69
      %s72 = sadd.s32 %s71, 1
      %p75 = scmp.eq.s32.totalorder %s25, 1
      %p76 = scmp.ne.s32.totalorder %s71, %s73
      %p77 = scmp.eq.s32.totalorder %s25, 0
      %p78 = por %p76, %p77
      %p79 = scmp.ne.s32.totalorder %s71, %s73
      %p80 = scmp.eq.s32.totalorder %s30, 1
      %p81 = por %p79, %p80
      %p82 = scmp.ne.s32.totalorder %s73, %s74
      %p83 = scmp.eq.s32.totalorder %s30, 0
      %p84 = por %p82, %p83
      %p85 = scmp.ne.s32.totalorder %s73, %s74
      %p86 = scmp.eq.s32.totalorder %s31, 1
      %p87 = por %p85, %p86
      %p89 = scmp.ne.s32.totalorder %s74, %s88
      %p90 = scmp.eq.s32.totalorder %s31, 0
      %p91 = por %p89, %p90
      %s93 = sadd.s32 %s92, 1
      %p96 = scmp.eq.s32.totalorder %s25, 1
      %p97 = scmp.ne.s32.totalorder %s92, %s94
      %p98 = scmp.eq.s32.totalorder %s25, 0
      %p99 = por %p97, %p98
      %p100 = scmp.ne.s32.totalorder %s92, %s94
      %p101 = scmp.eq.s32.totalorder %s30, 1
      %p102 = por %p100, %p101
      %p103 = scmp.ne.s32.totalorder %s94, %s95
      %p104 = scmp.eq.s32.totalorder %s30, 0
      %p105 = por %p103, %p104
      %p106 = scmp.ne.s32.totalorder %s94, %s95
      %p107 = scmp.eq.s32.totalorder %s31, 1
      %p108 = por %p106, %p107
      %p110 = scmp.ne.s32.totalorder %s95, %s109
      %p111 = scmp.eq.s32.totalorder %s31, 0
      %p112 = por %p110, %p111
      %s114 = sadd.s32 %s113, 1
      %p117 = scmp.eq.s32.totalorder %s25, 1
      %p118 = scmp.ne.s32.totalorder %s113, %s115
      %p119 = scmp.eq.s32.totalorder %s25, 0
      %p120 = por %p118, %p119
      %p121 = scmp.ne.s32.totalorder %s113, %s115
      %p122 = scmp.eq.s32.totalorder %s30, 1
      %p123 = por %p121, %p122
      %p124 = scmp.ne.s32.totalorder %s115, %s116
      %p125 = scmp.eq.s32.totalorder %s30, 0
      %p126 = por %p124, %p125
      %p127 = scmp.ne.s32.totalorder %s115, %s116
      %p128 = scmp.eq.s32.totalorder %s31, 1
      %p129 = por %p127, %p128
      %p131 = scmp.ne.s32.totalorder %s116, %s130
      %p132 = scmp.eq.s32.totalorder %s31, 0
      %p133 = por %p131, %p132
      %s135 = sadd.s32 %s134, 1
      %p138 = scmp.eq.s32.totalorder %s25, 1
      %p139 = scmp.ne.s32.totalorder %s134, %s136
      %p140 = scmp.eq.s32.totalorder %s25, 0
      %p141 = por %p139, %p140
      %p142 = scmp.ne.s32.totalorder %s134, %s136
      %p143 = scmp.eq.s32.totalorder %s30, 1
      %p144 = por %p142, %p143
      %p145 = scmp.ne.s32.totalorder %s136, %s137
      %p146 = scmp.eq.s32.totalorder %s30, 0
      %p147 = por %p145, %p146
      %p148 = scmp.ne.s32.totalorder %s136, %s137
      %p149 = scmp.eq.s32.totalorder %s31, 1
      %p150 = por %p148, %p149
      %p152 = scmp.ne.s32.totalorder %s137, %s151
      %p153 = scmp.eq.s32.totalorder %s31, 0
      %p154 = por %p152, %p153
      %s156 = sadd.s32 %s155, 1
      %p159 = scmp.eq.s32.totalorder %s25, 1
      %p160 = scmp.ne.s32.totalorder %s155, %s157
      %p161 = scmp.eq.s32.totalorder %s25, 0
      %p162 = por %p160, %p161
      %p163 = scmp.ne.s32.totalorder %s155, %s157
      %p164 = scmp.eq.s32.totalorder %s30, 1
      %p165 = por %p163, %p164
      %p166 = scmp.ne.s32.totalorder %s157, %s158
      %p167 = scmp.eq.s32.totalorder %s30, 0
      %p168 = por %p166, %p167
      %p169 = scmp.ne.s32.totalorder %s157, %s158
      %p170 = scmp.eq.s32.totalorder %s31, 1
      %p171 = por %p169, %p170
      %p173 = scmp.ne.s32.totalorder %s158, %s172
      %p174 = scmp.eq.s32.totalorder %s31, 0
      %p175 = por %p173, %p174
      %s177 = sadd.s32 %s176, 1
      %p180 = scmp.eq.s32.totalorder %s25, 1
      %p181 = scmp.ne.s32.totalorder %s176, %s178
      %p182 = scmp.eq.s32.totalorder %s25, 0
      %p183 = por %p181, %p182
      %p184 = scmp.ne.s32.totalorder %s176, %s178
      %p185 = scmp.eq.s32.totalorder %s30, 1
      %p186 = por %p184, %p185
      %p187 = scmp.ne.s32.totalorder %s178, %s179
      %p188 = scmp.eq.s32.totalorder %s30, 0
      %p189 = por %p187, %p188
      %p190 = scmp.ne.s32.totalorder %s178, %s179
      %p191 = scmp.eq.s32.totalorder %s31, 1
      %p192 = por %p190, %p191
      %p194 = scmp.ne.s32.totalorder %s179, %s193
      %p195 = scmp.eq.s32.totalorder %s31, 0
      %p196 = por %p194, %p195
      %s197 = ssub.s32 %s32, %s44
      %s198 = ssub.s32 %s33, %s40
      %s199 = sor.u32 %s197, %s198
      %p200 = scmp.eq.s32.totalorder %s199, 0
      %s202 = sadd.s32 %s201, 1
      %s203 = scalar_select %p200, %s201, %s202
      %p206 = pneg %p200
      %p207 = scmp.eq.s32.totalorder %s25, 1
      %p208 = por %p206, %p207
      %p209 = scmp.ne.s32.totalorder %s201, %s204
      %p210 = scmp.eq.s32.totalorder %s25, 0
      %p211 = por %p209, %p210
      %p212 = scmp.ne.s32.totalorder %s201, %s204
      %p213 = scmp.eq.s32.totalorder %s30, 1
      %p214 = por %p212, %p213
      %p215 = scmp.ne.s32.totalorder %s204, %s205
      %p216 = scmp.eq.s32.totalorder %s30, 0
      %p217 = por %p215, %p216
      %p218 = scmp.ne.s32.totalorder %s204, %s205
      %p219 = scmp.eq.s32.totalorder %s31, 1
      %p220 = por %p218, %p219
      %p222 = scmp.ne.s32.totalorder %s205, %s221
      %p223 = scmp.eq.s32.totalorder %s31, 0
      %p224 = por %p222, %p223
      %s225 = ssub.s32 %s32, %s44
      %s226 = ssub.s32 %s33, %s40
      %s227 = sor.u32 %s225, %s226
      %p228 = scmp.eq.s32.totalorder %s227, 0
      %s230 = sadd.s32 %s229, 1
      %s231 = scalar_select %p228, %s229, %s230
      %p234 = pneg %p228
      %p235 = scmp.eq.s32.totalorder %s25, 1
      %p236 = por %p234, %p235
      %p237 = scmp.ne.s32.totalorder %s229, %s232
      %p238 = scmp.eq.s32.totalorder %s25, 0
      %p239 = por %p237, %p238
      %p240 = scmp.ne.s32.totalorder %s229, %s232
      %p241 = scmp.eq.s32.totalorder %s30, 1
      %p242 = por %p240, %p241
      %p243 = scmp.ne.s32.totalorder %s232, %s233
      %p244 = scmp.eq.s32.totalorder %s30, 0
      %p245 = por %p243, %p244
      %p246 = scmp.ne.s32.totalorder %s232, %s233
      %p247 = scmp.eq.s32.totalorder %s31, 1
      %p248 = por %p246, %p247
      %p250 = scmp.ne.s32.totalorder %s233, %s249
      %p251 = scmp.eq.s32.totalorder %s31, 0
      %p252 = por %p250, %p251
      %p253 = scmp.le.s32.totalorder 1, %s25
      %p254 = scmp.lt.s32.totalorder %s25, 3
      %p255 = pnand %p253, %p254
      %p256 = pneg %p255
      // Predicated region
      $region9: #{tpu_custom_call.1} parent=5 // pred_check
        _
      $region10: #{tpu_custom_call.1} parent=5 // pred_check_branch
        %258 = sbr.rel (%p255) target = $region12
      $region11: #{tpu_custom_call.1} parent=5 // pred_region
        %s259 = ssub.s32 %s25, 1
        // Predicated region
        $region13: #{tpu_custom_call.1} parent=11 // pred_check
          %p260 = pneg %p84
        $region14: #{tpu_custom_call.1} parent=11 // pred_check_branch
          %262 = sbr.rel (%p260) target = $region16
        $region15: #{tpu_custom_call.1} parent=11 // pred_region
          %s264 = ssub.s32 256, 256
          %265 = vsyncadd [#allocation7], %s264
          %s266 = sshll.u32 [#allocation6], 4
          %s267 = int_to_ptr.vmem [resolvable:$true] %s266
          %272 = dma.hbm_to_vmem [thread:$0]  %s1, 256, %s267, [#allocation7], 64, 64, 4
        $region16: #{tpu_custom_call.1} parent=11 // pred_fallthru
          _
        // Predicated region
        $region17: #{tpu_custom_call.1} parent=11 // pred_check
          %p273 = pneg %p105
        $region18: #{tpu_custom_call.1} parent=11 // pred_check_branch
          %275 = sbr.rel (%p273) target = $region20
        $region19: #{tpu_custom_call.1} parent=11 // pred_region
          _
        $region20: #{tpu_custom_call.1} parent=11 // pred_fallthru
          _
        // Predicated region
        $region21: #{tpu_custom_call.1} parent=11 // pred_check
          %p276 = pneg %p126
        $region22: #{tpu_custom_call.1} parent=11 // pred_check_branch
          %278 = sbr.rel (%p276) target = $region24
        $region23: #{tpu_custom_call.1} parent=11 // pred_region
          %s280 = ssub.s32 256, 256
          %281 = vsyncadd [#allocation7], %s280
          %s282 = sshll.u32 [#allocation8], 4
          %s283 = int_to_ptr.vmem [resolvable:$true] %s282
          %288 = dma.hbm_to_vmem [thread:$0]  %s3, 256, %s283, [#allocation7], 64, 64, 4
        $region24: #{tpu_custom_call.1} parent=11 // pred_fallthru
          _
        // Predicated region
        $region25: #{tpu_custom_call.1} parent=11 // pred_check
          %p289 = pneg %p147
        $region26: #{tpu_custom_call.1} parent=11 // pred_check_branch
          %291 = sbr.rel (%p289) target = $region28
        $region27: #{tpu_custom_call.1} parent=11 // pred_region
          _
        $region28: #{tpu_custom_call.1} parent=11 // pred_fallthru
          _
        // Predicated region
        $region29: #{tpu_custom_call.1} parent=11 // pred_check
          %p292 = pneg %p168
        $region30: #{tpu_custom_call.1} parent=11 // pred_check_branch
          %294 = sbr.rel (%p292) target = $region32
        $region31: #{tpu_custom_call.1} parent=11 // pred_region
          _
        $region32: #{tpu_custom_call.1} parent=11 // pred_fallthru
          _
        // Predicated region
        $region33: #{tpu_custom_call.1} parent=11 // pred_check
          %p295 = pneg %p189
        $region34: #{tpu_custom_call.1} parent=11 // pred_check_branch
          %297 = sbr.rel (%p295) target = $region36
        $region35: #{tpu_custom_call.1} parent=11 // pred_region
          _
        $region36: #{tpu_custom_call.1} parent=11 // pred_fallthru
          _
      $region12: #{tpu_custom_call.1} parent=5 // pred_fallthru
        _
      %p298 = scmp.lt.s32.totalorder %s25, 2
      // Predicated region
      $region37: #{tpu_custom_call.1} parent=5 // pred_check
        %p299 = pneg %p298
      $region38: #{tpu_custom_call.1} parent=5 // pred_check_branch
        %301 = sbr.rel (%p299) target = $region40
      $region39: #{tpu_custom_call.1} parent=5 // pred_region
        // Predicated region
        $region41: #{tpu_custom_call.1} parent=39 // pred_check
          %p302 = pneg %p57
        $region42: #{tpu_custom_call.1} parent=39 // pred_check_branch
          %304 = sbr.rel (%p302) target = $region44
        $region43: #{tpu_custom_call.1} parent=39 // pred_region
          %s305 = sand.u32 %s47, 1
          %s306 = scalar_lea.sflag [#allocation4], %s305
          %s307 = sand.u32 %s47, 1
          %s308 = smul.addr %s307, 8
          %s309 = scalar_lea.vmem [#allocation3], %s308
          %s311 = ssub.s32 128, 128
          %312 = vsyncadd %s306, %s311
          %s313 = smul.addr %s32, 128
          %s314 = scalar_lea.hbm %s0, %s313
          %s316 = sshll.u32 %s309, 4
          %s317 = int_to_ptr.vmem [resolvable:$true] %s316
          %319 = dma.hbm_to_vmem [thread:$0]  %s314, 128, %s317, %s306
        $region44: #{tpu_custom_call.1} parent=39 // pred_fallthru
          _
      $region40: #{tpu_custom_call.1} parent=5 // pred_fallthru
        _
      %p320 = scmp.le.s32.totalorder 1, %s25
      %p321 = scmp.lt.s32.totalorder %s25, 3
      %p322 = pnand %p320, %p321
      %p323 = pneg %p322
      // Predicated region
      $region45: #{tpu_custom_call.1} parent=5 // pred_check
        _
      $region46: #{tpu_custom_call.1} parent=5 // pred_check_branch
        %325 = sbr.rel (%p322) target = $region48
      $region47: #{tpu_custom_call.1} parent=5 // pred_region
        %s326 = ssub.s32 %s25, 1
        %s327 = sand.u32 %s50, 1
        %s328 = scalar_lea.sflag [#allocation4], %s327
        %s329 = sand.u32 %s50, 1
        %s330 = smul.addr %s329, 8
        %s331 = scalar_lea.vmem [#allocation3], %s330
        // Predicated region
        $region49: #{tpu_custom_call.1} parent=47 // pred_check
          %p332 = pneg %p63
        $region50: #{tpu_custom_call.1} parent=47 // pred_check_branch
          %334 = sbr.rel (%p332) target = $region52
        $region51: #{tpu_custom_call.1} parent=47 // pred_region
          %335 = dma.done %s328, 128
        $region52: #{tpu_custom_call.1} parent=47 // pred_fallthru
          _
        // Predicated region
        $region53: #{tpu_custom_call.1} parent=47 // pred_check
          %p336 = pneg %p84
        $region54: #{tpu_custom_call.1} parent=47 // pred_check_branch
          %338 = sbr.rel (%p336) target = $region56
        $region55: #{tpu_custom_call.1} parent=47 // pred_region
          %339 = dma.done [#allocation7], 256
        $region56: #{tpu_custom_call.1} parent=47 // pred_fallthru
          _
        // Predicated region
        $region57: #{tpu_custom_call.1} parent=47 // pred_check
          %p340 = pneg %p126
        $region58: #{tpu_custom_call.1} parent=47 // pred_check_branch
          %342 = sbr.rel (%p340) target = $region60
        $region59: #{tpu_custom_call.1} parent=47 // pred_region
          %343 = dma.done [#allocation7], 256
        $region60: #{tpu_custom_call.1} parent=47 // pred_fallthru
          _
        %s344 = sand.u32 %s50, 1
        %s345 = scalar_lea.sflag [#allocation4], %s344
        %s346 = sand.u32 %s50, 1
        %s347 = smul.addr %s346, 8
        %s348 = scalar_lea.vmem [#allocation3], %s347
        %p349 = pneg %p63
        %p350 = pneg %p60
        %p351 = pneg %p84
        %p352 = pneg %p81
        %p353 = pneg %p105
        %p354 = pneg %p102
        %p355 = pneg %p126
        %p356 = pneg %p123
        %p357 = pneg %p147
        %p358 = pneg %p144
        %p359 = pneg %p168
        %p360 = pneg %p165
        %p361 = pneg %p189
        %p362 = pneg %p186
        %p363 = pneg %p217
        %p364 = pneg %p214
        %s365 = sand.u32 %s204, 1
        %s366 = scalar_lea.sflag [#allocation5], %s365
        %s367 = sand.u32 %s204, 1
        %s368 = smul.addr %s367, 8
        %s369 = scalar_lea.vmem [#allocation9], %s368
        %p370 = pneg %p245
        %p371 = pneg %p242
        %s372 = sand.u32 %s232, 1
        %s373 = scalar_lea.sflag [#allocation11], %s372
        %s374 = sand.u32 %s232, 1
        %s375 = smul.addr %s374, 4
        %s376 = scalar_lea.vmem [#allocation10], %s375
        %p378 = scmp.eq.s32.totalorder %s35, 0
        // Predicated region
        $region61: #{tpu_custom_call.1} parent=47 // pred_check
          %p379 = pneg %p378
        $region62: #{tpu_custom_call.1} parent=47 // pred_check_branch
          %381 = sbr.rel (%p379) target = $region64
        $region63: #{tpu_custom_call.1} parent=47 // pred_region
          %v382 = vld [vmem:[%s331] sm:$0xff]
          %v383 = vpack.c.bf16 %v382, %v382
          %v384 = vld [vmem:[#allocation6] sm:$0xf]
          %v385 = vld [vmem:[#allocation6 + $0x4] sm:$0xf]
          %v386 = vld [vmem:[#allocation6 + $0x8] sm:$0xf]
          %v387 = vld [vmem:[#allocation6 + $0xc] sm:$0xf]
          %v388 = vld [vmem:[%s2] sm:$0x1]
          %v390 = vlaneseq
          %v391 = vshrl.u32 %v390, 7
          %v392 = vsub.s32 0, %v391
          %v393 = vrot.slane %v388, %v392
          %v399 = vunpack.c.l.b16 %v384
          %v400 = vunpack.c.l.b16 %v385
          %v401 = vunpack.c.l.b16 %v386
          %v402 = vunpack.c.l.b16 %v387
          %v403 = vpack.c.b16 %v400, %v399
          %v404 = vpack.c.b16 %v402, %v401
          %vm407 = vcmask 261120
          %v409 = vsel %vm407, %v383, 0
          %411 = vmatprep.subr.bf16.mxu0 0
          %412 = vmatpush1.bf16.msra.mxu0 %v403
          %413 = vmatprep.subr.bf16.mxu0 0
          %414 = vmatpush1.bf16.msra.mxu0 %v404
          %415 = vmatprep.subr.bf16.mxu0 0
          %416 = vmatpush1.bf16.msra.mxu0 0
          %417 = vmatprep.subr.bf16.mxu0 0
          %418 = vmatpush1.bf16.msra.mxu0 0
          %419 = vmatprep.subr.bf16.mxu0 0
          %420 = vmatpush1.bf16.msra.mxu0 0
          %421 = vmatprep.subr.bf16.mxu0 0
          %422 = vmatpush1.bf16.msra.mxu0 0
          %423 = vmatprep.subr.bf16.mxu0 0
          %424 = vmatpush1.bf16.msra.mxu0 0
          %425 = vmatprep.subr.bf16.mxu0 0
          %426 = vmatpush1.bf16.msra.mxu0 0
          %427 = vmatprep.subr.bf16.mxu0 0
          %428 = vmatpush1.bf16.msra.mxu0 0
          %429 = vmatprep.subr.bf16.mxu0 0
          %430 = vmatpush1.bf16.msra.mxu0 0
          %431 = vmatprep.subr.bf16.mxu0 0
          %432 = vmatpush1.bf16.msra.mxu0 0
          %433 = vmatprep.subr.bf16.mxu0 0
          %434 = vmatpush1.bf16.msra.mxu0 0
          %435 = vmatprep.subr.bf16.mxu0 0
          %436 = vmatpush1.bf16.msra.mxu0 0
          %437 = vmatprep.subr.bf16.mxu0 0
          %438 = vmatpush1.bf16.msra.mxu0 0
          %439 = vmatprep.subr.bf16.mxu0 0
          %440 = vmatpush1.bf16.msra.mxu0 0
          %441 = vmatprep.subr.bf16.mxu0 0
          %442 = vmatpush1.bf16.msra.mxu0 0
          %443 = vmatprep.mubr.bf16.mxu0 0
          %444 = vmatmul.mubr.bf16.gmra.mrb[0].mxu0 %v409
          %v445 = vpop.f32.mrb[0].mxu0
          %v446 = vadd.f32 %v393, %v445
          %v447 = vpop.f32.mrb[0].mxu0
          %v448 = vpop.f32.mrb[0].mxu0
          %v449 = vpop.f32.mrb[0].mxu0
          %450 = vdwg.mxu0
          %v451 = vpack.c.bf16 %v446, %v446
          %vm452 = vcmask 257024
          %453 = vst.msk [vmem:[#allocation2] sm:$0xf] %vm452, %v451
          %v455 = vunpack.c.l.b16 %v451
          %v456 = vpack.c.b16 %v455, %v455
          %457 = vrot.lane.b32.xlu0 %v456, 96
          %v458 = vpop.permute.xlu0 %457
          %s460 = scalar_lea.vmem [#allocation2], 4
          %461 = vst.msk [vmem:[%s460] sm:$0xf] %vm452, %v458
          %462 = vrot.lane.b32.xlu0 %v456, 64
          %v463 = vpop.permute.xlu0 %462
          %s465 = scalar_lea.vmem [#allocation2], 8
          %466 = vst.msk [vmem:[%s465] sm:$0xf] %vm452, %v463
        $region64: #{tpu_custom_call.1} parent=47 // pred_fallthru
          _
        %s467 = smul.u32 %s35, 8
        %s468 = sshra.s32 %s467, 3
        %s469 = sand.u32 %s467, 7
        %s470 = smul.addr %s468, 4
        %s471 = scalar_lea.vmem [#allocation2], %s470
        %v472 = vld [vmem:[%s471] sm:$0xf]
        %s473 = scalar_lea.vmem [#allocation2], 4
        %v474 = vld [vmem:[%s473] sm:$0xf]
        %s475 = scalar_lea.vmem [#allocation2], 8
        %v476 = vld [vmem:[%s475] sm:$0xf]
        %vm477 = vcmask 261120
        %v479 = vsel %vm477, %v472, 0
        %v482 = vsel %vm477, %v474, 0
        %484 = vmatprep.subr.bf16.mxu0 0
        %485 = vmatpush1.bf16.xpose.msra.mxu0 %v482
        %486 = vmatprep.subr.bf16.mxu0 0
        %487 = vmatpush1.bf16.xpose.msra.mxu0 0
        %488 = vmatprep.subr.bf16.mxu0 0
        %489 = vmatpush1.bf16.xpose.msra.mxu0 0
        %490 = vmatprep.subr.bf16.mxu0 0
        %491 = vmatpush1.bf16.xpose.msra.mxu0 0
        %492 = vmatprep.subr.bf16.mxu0 0
        %493 = vmatpush1.bf16.xpose.msra.mxu0 0
        %494 = vmatprep.subr.bf16.mxu0 0
        %495 = vmatpush1.bf16.xpose.msra.mxu0 0
        %496 = vmatprep.subr.bf16.mxu0 0
        %497 = vmatpush1.bf16.xpose.msra.mxu0 0
        %498 = vmatprep.subr.bf16.mxu0 0
        %499 = vmatpush1.bf16.xpose.msra.mxu0 0
        %500 = vmatprep.subr.bf16.mxu0 0
        %501 = vmatpush1.bf16.xpose.msra.mxu0 0
        %502 = vmatprep.subr.bf16.mxu0 0
        %503 = vmatpush1.bf16.xpose.msra.mxu0 0
        %504 = vmatprep.subr.bf16.mxu0 0
        %505 = vmatpush1.bf16.xpose.msra.mxu0 0
        %506 = vmatprep.subr.bf16.mxu0 0
        %507 = vmatpush1.bf16.xpose.msra.mxu0 0
        %508 = vmatprep.subr.bf16.mxu0 0
        %509 = vmatpush1.bf16.xpose.msra.mxu0 0
        %510 = vmatprep.subr.bf16.mxu0 0
        %511 = vmatpush1.bf16.xpose.msra.mxu0 0
        %512 = vmatprep.subr.bf16.mxu0 0
        %513 = vmatpush1.bf16.xpose.msra.mxu0 0
        %514 = vmatprep.subr.bf16.mxu0 0
        %515 = vmatpush1.bf16.xpose.msra.mxu0 0
        %516 = vmatprep.mubr.bf16.mxu0 0
        %517 = vmatmul.mubr.bf16.gmra.mrb[0].mxu0 %v479
        %v518 = vpop.f32.mrb[0].mxu0
        %v519 = vadd.f32 0.0, %v518
        %v520 = vpop.f32.mrb[0].mxu0
        %v521 = vpop.f32.mrb[0].mxu0
        %v522 = vpop.f32.mrb[0].mxu0
        %523 = vdwg.mxu0
        %v524 = vmul.f32 %v519, 0.17677669
        %vm525 = vcmask 64512
        %v526 = vsel %vm525, %v524, -inf
        %527 = vmax.xlane.f32.xlu0 %v526
        %v528 = vpop.xlane.xlu0 %527
        %v529 = vsub.f32 %v524, %v528
        %v530 = vmul.f32 %v529, 1.442695
        %v531 = vpow.pop %v530
        %v532 = vsel %vm525, %v531, 0.0
        %533 = vadd.xlane.f32.xlu0 %v532
        %v534 = vpop.xlane.xlu0 %533
        %v535 = vrcp.pop %v534
        %v536 = vmul.f32 %v531, %v535
        %s537 = scalar_lea.vmem %s331, %s467 [#allocation3]
        %v538 = vld [vmem:[%s537] sm:$0xff]
        %v539 = vpack.c.bf16 %v536, %v536
        %v541 = vsel %vm525, %v539, 0
        %vm543 = vcmask 1043456
        %v545 = vsel %vm543, %v476, 0
        %547 = vmatprep.subr.bf16.mxu0 0
        %548 = vmatpush1.bf16.msra.mxu0 %v545
        %549 = vmatprep.subr.bf16.mxu0 0
        %550 = vmatpush1.bf16.msra.mxu0 0
        %551 = vmatprep.subr.bf16.mxu0 0
        %552 = vmatpush1.bf16.msra.mxu0 0
        %553 = vmatprep.subr.bf16.mxu0 0
        %554 = vmatpush1.bf16.msra.mxu0 0
        %555 = vmatprep.subr.bf16.mxu0 0
        %556 = vmatpush1.bf16.msra.mxu0 0
        %557 = vmatprep.subr.bf16.mxu0 0
        %558 = vmatpush1.bf16.msra.mxu0 0
        %559 = vmatprep.subr.bf16.mxu0 0
        %560 = vmatpush1.bf16.msra.mxu0 0
        %561 = vmatprep.subr.bf16.mxu0 0
        %562 = vmatpush1.bf16.msra.mxu0 0
        %563 = vmatprep.subr.bf16.mxu0 0
        %564 = vmatpush1.bf16.msra.mxu0 0
        %565 = vmatprep.subr.bf16.mxu0 0
        %566 = vmatpush1.bf16.msra.mxu0 0
        %567 = vmatprep.subr.bf16.mxu0 0
        %568 = vmatpush1.bf16.msra.mxu0 0
        %569 = vmatprep.subr.bf16.mxu0 0
        %570 = vmatpush1.bf16.msra.mxu0 0
        %571 = vmatprep.subr.bf16.mxu0 0
        %572 = vmatpush1.bf16.msra.mxu0 0
        %573 = vmatprep.subr.bf16.mxu0 0
        %574 = vmatpush1.bf16.msra.mxu0 0
        %575 = vmatprep.subr.bf16.mxu0 0
        %576 = vmatpush1.bf16.msra.mxu0 0
        %577 = vmatprep.subr.bf16.mxu0 0
        %578 = vmatpush1.bf16.msra.mxu0 0
        %579 = vmatprep.mubr.bf16.mxu0 0
        %580 = vmatmul.mubr.bf16.gmra.mrb[0].mxu0 %v541
        %v581 = vpop.f32.mrb[0].mxu0
        %v582 = vadd.f32 %v538, %v581
        %v583 = vpop.f32.mrb[0].mxu0
        %v584 = vpop.f32.mrb[0].mxu0
        %v585 = vpop.f32.mrb[0].mxu0
        %586 = vdwg.mxu0
        %v587 = vsel %vm477, %v582, 0.0
        %588 = vadd.xlane.f32.xlu0 %v587
        %v589 = vpop.xlane.xlu0 %588
        %v590 = vrcp.pop 32.0
        %v591 = vmul.f32 %v589, %v590
        %v592 = vsub.f32 %v582, %v591
        %v593 = vmul.f32 %v592, %v592
        %v594 = vsel %vm477, %v593, 0.0
        %595 = vadd.xlane.f32.xlu0 %v594
        %v596 = vpop.xlane.xlu0 %595
        %v597 = vmul.f32 %v596, %v590
        %v598 = vadd.f32 %v597, 1e-05
        %v599 = vrsqrt.pop %v598
        %v600 = vmul.f32 %v592, %v599
        %v601 = vld [vmem:[%s5] sm:$0x1]
        %v603 = vlaneseq
        %v604 = vshrl.u32 %v603, 7
        %v605 = vsub.s32 0, %v604
        %v606 = vrot.slane %v601, %v605
        %v608 = vmul.f32 %v600, %v606
        %v609 = vld [vmem:[%s6] sm:$0x1]
        %v611 = vlaneseq
        %v612 = vshrl.u32 %v611, 7
        %v613 = vsub.s32 0, %v612
        %v614 = vrot.slane %v609, %v613
        %v616 = vadd.f32 %v608, %v614
        %v617 = vpack.c.bf16 %v616, %v616
        %v618 = vld [vmem:[#allocation8] sm:$0xf]
        %v619 = vld [vmem:[#allocation8 + $0x4] sm:$0xf]
        %v620 = vld [vmem:[#allocation8 + $0x8] sm:$0xf]
        %v621 = vld [vmem:[#allocation8 + $0xc] sm:$0xf]
        %v622 = vld [vmem:[%s4] sm:$0x1]
        %v624 = vlaneseq
        %v625 = vshrl.u32 %v624, 7
        %v626 = vsub.s32 0, %v625
        %v627 = vrot.slane %v622, %v626
        %v633 = vunpack.c.l.b16 %v618
        %v634 = vunpack.c.l.b16 %v619
        %v635 = vunpack.c.l.b16 %v620
        %v636 = vunpack.c.l.b16 %v621
        %v637 = vpack.c.b16 %v634, %v633
        %v638 = vpack.c.b16 %v636, %v635
        %v642 = vsel %vm477, %v617, 0
        %644 = vmatprep.subr.bf16.mxu0 0
        %645 = vmatpush1.bf16.msra.mxu0 %v637
        %646 = vmatprep.subr.bf16.mxu0 0
        %647 = vmatpush1.bf16.msra.mxu0 %v638
        %648 = vmatprep.subr.bf16.mxu0 0
        %649 = vmatpush1.bf16.msra.mxu0 0
        %650 = vmatprep.subr.bf16.mxu0 0
        %651 = vmatpush1.bf16.msra.mxu0 0
        %652 = vmatprep.subr.bf16.mxu0 0
        %653 = vmatpush1.bf16.msra.mxu0 0
        %654 = vmatprep.subr.bf16.mxu0 0
        %655 = vmatpush1.bf16.msra.mxu0 0
        %656 = vmatprep.subr.bf16.mxu0 0
        %657 = vmatpush1.bf16.msra.mxu0 0
        %658 = vmatprep.subr.bf16.mxu0 0
        %659 = vmatpush1.bf16.msra.mxu0 0
        %660 = vmatprep.subr.bf16.mxu0 0
        %661 = vmatpush1.bf16.msra.mxu0 0
        %662 = vmatprep.subr.bf16.mxu0 0
        %663 = vmatpush1.bf16.msra.mxu0 0
        %664 = vmatprep.subr.bf16.mxu0 0
        %665 = vmatpush1.bf16.msra.mxu0 0
        %666 = vmatprep.subr.bf16.mxu0 0
        %667 = vmatpush1.bf16.msra.mxu0 0
        %668 = vmatprep.subr.bf16.mxu0 0
        %669 = vmatpush1.bf16.msra.mxu0 0
        %670 = vmatprep.subr.bf16.mxu0 0
        %671 = vmatpush1.bf16.msra.mxu0 0
        %672 = vmatprep.subr.bf16.mxu0 0
        %673 = vmatpush1.bf16.msra.mxu0 0
        %674 = vmatprep.subr.bf16.mxu0 0
        %675 = vmatpush1.bf16.msra.mxu0 0
        %676 = vmatprep.mubr.bf16.mxu0 0
        %677 = vmatmul.mubr.bf16.gmra.mrb[0].mxu0 %v642
        %v678 = vpop.f32.mrb[0].mxu0
        %v679 = vadd.f32 %v627, %v678
        %v680 = vpop.f32.mrb[0].mxu0
        %v681 = vpop.f32.mrb[0].mxu0
        %v682 = vpop.f32.mrb[0].mxu0
        %683 = vdwg.mxu0
        %v684 = vadd.f32 %v679, %v582
        %685 = vst.msk [vmem:[%s369] sm:$0xff] %vm477, %v684
        %vm686 = vcmask 60416
        %687 = vst.msk [vmem:[%s376] sm:$0xf] %vm686, %v539
        %s688 = sand.u32 %s204, 1
        %s689 = scalar_lea.sflag [#allocation5], %s688
        %s690 = sand.u32 %s204, 1
        %s691 = smul.addr %s690, 8
        %s692 = scalar_lea.vmem [#allocation9], %s691
        %s693 = sand.u32 %s232, 1
        %s694 = scalar_lea.sflag [#allocation11], %s693
        %s695 = sand.u32 %s232, 1
        %s696 = smul.addr %s695, 4
        %s697 = scalar_lea.vmem [#allocation10], %s696
        // Predicated region
        $region65: #{tpu_custom_call.1} parent=47 // pred_check
          %p698 = pneg %p214
        $region66: #{tpu_custom_call.1} parent=47 // pred_check_branch
          %700 = sbr.rel (%p698) target = $region68
        $region67: #{tpu_custom_call.1} parent=47 // pred_region
          %s702 = ssub.s32 128, 128
          %703 = vsyncadd %s689, %s702
          %s704 = sadd.s32 %s35, %s34
          %s705 = smul.addr %s704, 128
          %s706 = scalar_lea.hbm %s7, %s705
          %s708 = sshll.u32 %s692, 4
          %s709 = int_to_ptr.vmem [resolvable:$true] %s708
          %711 = dma.vmem_to_hbm [thread:$0]  %s709, 128, %s706, %s689
        $region68: #{tpu_custom_call.1} parent=47 // pred_fallthru
          _
        // Predicated region
        $region69: #{tpu_custom_call.1} parent=47 // pred_check
          %p712 = pneg %p242
        $region70: #{tpu_custom_call.1} parent=47 // pred_check_branch
          %714 = sbr.rel (%p712) target = $region72
        $region71: #{tpu_custom_call.1} parent=47 // pred_region
          %s716 = ssub.s32 64, 64
          %717 = vsyncadd %s694, %s716
          %s718 = sadd.s32 %s35, %s34
          %s719 = smul.addr %s718, 64
          %s720 = scalar_lea.hbm %s8, %s719
          %s722 = sshll.u32 %s697, 4
          %s723 = int_to_ptr.vmem [resolvable:$true] %s722
          %725 = dma.vmem_to_hbm [thread:$0]  %s723, 64, %s720, %s694
        $region72: #{tpu_custom_call.1} parent=47 // pred_fallthru
          _
      $region48: #{tpu_custom_call.1} parent=5 // pred_fallthru
        _
      %p726 = scmp.le.s32.totalorder 2, %s25
      // Predicated region
      $region73: #{tpu_custom_call.1} parent=5 // pred_check
        %p727 = pneg %p726
      $region74: #{tpu_custom_call.1} parent=5 // pred_check_branch
        %729 = sbr.rel (%p727) target = $region76
      $region75: #{tpu_custom_call.1} parent=5 // pred_region
        %s730 = ssub.s32 %s25, 2
        // Predicated region
        $region77: #{tpu_custom_call.1} parent=75 // pred_check
          %p731 = pneg %p220
        $region78: #{tpu_custom_call.1} parent=75 // pred_check_branch
          %733 = sbr.rel (%p731) target = $region80
        $region79: #{tpu_custom_call.1} parent=75 // pred_region
          %s734 = sand.u32 %s205, 1
          %s735 = scalar_lea.sflag [#allocation5], %s734
          %s736 = sand.u32 %s205, 1
          %s737 = smul.addr %s736, 8
          %s738 = scalar_lea.vmem [#allocation9], %s737
          %739 = dma.done %s735, 128
        $region80: #{tpu_custom_call.1} parent=75 // pred_fallthru
          _
        // Predicated region
        $region81: #{tpu_custom_call.1} parent=75 // pred_check
          %p740 = pneg %p248
        $region82: #{tpu_custom_call.1} parent=75 // pred_check_branch
          %742 = sbr.rel (%p740) target = $region84
        $region83: #{tpu_custom_call.1} parent=75 // pred_region
          %s743 = sand.u32 %s233, 1
          %s744 = scalar_lea.sflag [#allocation11], %s743
          %s745 = sand.u32 %s233, 1
          %s746 = smul.addr %s745, 4
          %s747 = scalar_lea.vmem [#allocation10], %s746
          %748 = dma.done %s744, 64
        $region84: #{tpu_custom_call.1} parent=75 // pred_fallthru
          _
      $region76: #{tpu_custom_call.1} parent=5 // pred_fallthru
        _
    $region6: #{tpu_custom_call.1} parent=1 // loop_footer
      %s29 = sadd.s32 1, %s25
    $region7: #{tpu_custom_call.1} parent=1 // loop_footer_branch
      %24 = sbr.rel target = $region3
    $region8: #{tpu_custom_call.1} parent=1 // loop_exit
      _
    %749 = vsyncpa [#allocation4], 1
    %s750 = scalar_lea.sflag [#allocation4], 1
    %751 = vsyncpa %s750, 1
    %752 = vsyncpa [#allocation7], 1
    %753 = vsyncpa [#allocation5], 1
    %s754 = scalar_lea.sflag [#allocation5], 1
    %755 = vsyncpa %s754, 1
    %756 = vsyncpa [#allocation11], 1
    %s757 = scalar_lea.sflag [#allocation11], 1
    %758 = vsyncpa %s757, 1

</llo_original>
